<compile_context>
chip_gen: v5e
topology: v5e:2x2
jax: 0.10.0
libtpu: 0.0.40
codegen_flags: <defaults>
</compile_context>

<pallas_src>
import functools

import jax
import jax.numpy as jnp
from jax.experimental import pallas as pl
from jax.experimental.pallas import tpu as pltpu


def _rmsnorm_kernel(x_ref, o_ref, *, eps, scale_in_f32):
    # x_ref / o_ref: (block_rows, hidden)
    x = x_ref[...]
    xf = x.astype(jnp.float32)
    ms = jnp.mean(xf * xf, axis=-1, keepdims=True)      # (block_rows, 1), f32
    inv = jax.lax.rsqrt(ms + eps)                        # EUP rsqrt (free slot)
    if scale_in_f32:
        # f32 multiply + single downcast: matches the PyTorch/f32 reference.
        o_ref[...] = (xf * inv).astype(o_ref.dtype)
    else:
        # Input-dtype multiply (v7x bf16/fp8 fast path; identical for f32).
        o_ref[...] = (x * inv.astype(x.dtype)).astype(o_ref.dtype)


def _round_up(x, m):
    return ((x + m - 1) // m) * m


def _vmem_capacity_bytes():
    try:
        return int(pltpu.get_tpu_info().vmem_capacity_bytes)
    except Exception:
        # Conservative default (v7x-sized) if the query is unavailable.
        return 64 * 1024 * 1024


def _choose_block_rows(rows, hidden, itemsize, vmem_cap, is_small_vmem):
    # Sublane packing: f32 -> 8 rows, bf16 -> 16, int8/fp8 -> 32.
    pack = 8 * max(1, 4 // max(itemsize, 1))

    row_bytes_in = hidden * itemsize
    # Conservative per-row VMEM footprint of one grid step:
    #   2 double-buffered input tiles + 2 output tiles (itemsize each)
    #   + ~1 f32 live intermediate for the upcast/squared values.
    bytes_per_row = hidden * (4 * itemsize + 4)

    # Total VMEM budget: leave headroom for Mosaic scratch / regalloc.
    vmem_budget = int(vmem_cap * (0.70 if is_small_vmem else 0.60))

    # Per-generation per-input-buffer targets/caps (bytes, not rows).
    target_buf_bytes = (6 if is_small_vmem else 12) * 1024 * 1024
    max_buf_bytes = (8 if is_small_vmem else 16) * 1024 * 1024

    max_rows_by_vmem = max(pack, vmem_budget // max(bytes_per_row, 1))
    target_rows = max(pack, target_buf_bytes // max(row_bytes_in, 1))
    cap_rows = max(pack, max_buf_bytes // max(row_bytes_in, 1))

    block_rows = min(max_rows_by_vmem, target_rows, cap_rows,
                     _round_up(rows, pack))

    # Keep ~4 pipelined steps per TensorCore (assume 2 TCs on small-VMEM
    # chips, i.e. v7x) so DMA-in / compute / DMA-out can stream, but never
    # shrink the tile below ~1 MiB of input (per-step overhead floor).
    num_cores = 2 if is_small_vmem else 1
    min_steps = 4 * num_cores
    floor_rows = max(pack, (1 * 1024 * 1024) // max(row_bytes_in, 1))
    if rows >= min_steps * pack:
        steps_rows = _round_up(pl.cdiv(rows, min_steps), pack)
        if steps_rows >= floor_rows:
            block_rows = min(block_rows, steps_rows)

    return max(pack, (block_rows // pack) * pack)


def rmsnorm(x, eps: float = 1e-6, block_rows=None):
    """Applies RMSNorm (no learnable weight) over the last axis of x."""
    orig_shape = x.shape
    hidden = orig_shape[-1]
    x2d = x.reshape(-1, hidden)
    rows = x2d.shape[0]
    if rows == 0 or hidden == 0:
        return x

    itemsize = jnp.dtype(x.dtype).itemsize
    vmem_cap = _vmem_capacity_bytes()
    is_small_vmem = vmem_cap <= 96 * 1024 * 1024   # v7x-like (64 MiB per TC)

    if block_rows is None:
        block_rows = _choose_block_rows(rows, hidden, itemsize, vmem_cap,
                                        is_small_vmem)

    grid = (pl.cdiv(rows, block_rows),)

    # f32 scale multiply on v5e/v6e (free + reference-exact); keep the
    # input-dtype multiply only on v7x where the VPU margin is thinner.
    scale_in_f32 = (itemsize == 4) or (not is_small_vmem)

    # Scoped-VMEM limit: real footprint x 1.25 with per-generation cap.
    tile_footprint = block_rows * hidden * (4 * itemsize + 4)
    vmem_limit_cap = (56 if is_small_vmem else 100) * 1024 * 1024
    vmem_limit = int(min(vmem_limit_cap,
                         max(16 * 1024 * 1024, tile_footprint * 1.25)))

    cost = pl.CostEstimate(
        flops=3 * rows * hidden,
        transcendentals=rows,
        bytes_accessed=2 * rows * hidden * itemsize,
    )

    out = pl.pallas_call(
        functools.partial(_rmsnorm_kernel, eps=eps, scale_in_f32=scale_in_f32),
        out_shape=jax.ShapeDtypeStruct((rows, hidden), x.dtype),
        grid_spec=pltpu.PrefetchScalarGridSpec(
            num_scalar_prefetch=0,
            grid=grid,
            in_specs=[pl.BlockSpec((block_rows, hidden), lambda i: (i, 0))],
            out_specs=pl.BlockSpec((block_rows, hidden), lambda i: (i, 0)),
        ),
        compiler_params=pltpu.CompilerParams(
            dimension_semantics=("parallel",),
            vmem_limit_bytes=vmem_limit,
        ),
        cost_estimate=cost,
    )(x2d)

    return out.reshape(orig_shape)


if __name__ == "__main__":
    key = jax.random.PRNGKey(0)
    eps = 1e-6

    def ref_rmsnorm(x):
        xf = x.astype(jnp.float32)
        y = xf * jax.lax.rsqrt(jnp.mean(xf * xf, axis=-1, keepdims=True) + eps)
        return y.astype(x.dtype)

    # Shape implied by the module's forward: (batch, seq, hidden).
    k1, k2, k3 = jax.random.split(key, 3)

    x1 = jax.random.normal(k1, (2, 8, 32), dtype=jnp.float32)
    y1 = jax.block_until_ready(rmsnorm(x1, eps=eps))
    assert y1.shape == x1.shape and y1.dtype == x1.dtype
    assert jnp.allclose(y1, ref_rmsnorm(x1), atol=1e-5, rtol=1e-5)

    # Ragged row count (15 rows) + lane-dense hidden exercises the tail-block
    # path with no pad/slice round trip.
    x2 = jax.random.normal(k2, (3, 5, 256), dtype=jnp.float32)
    y2 = jax.block_until_ready(rmsnorm(x2, eps=eps))
    assert y2.shape == x2.shape and y2.dtype == x2.dtype
    assert jnp.allclose(y2, ref_rmsnorm(x2), atol=1e-5, rtol=1e-5)

    # bf16 input: exercises the f32-scale (v5e/v6e) / bf16-scale (v7x) path.
    x3 = jax.random.normal(k3, (2, 8, 128), dtype=jnp.bfloat16)
    y3 = jax.block_until_ready(rmsnorm(x3, eps=eps))
    assert y3.shape == x3.shape and y3.dtype == x3.dtype
    assert jnp.allclose(y3.astype(jnp.float32),
                        ref_rmsnorm(x3).astype(jnp.float32),
                        atol=2e-2, rtol=2e-2)

    print("KERNEL_OK")
</pallas_src>

<mosaic_0001>
module attributes {stable_mosaic.version = 11 : i64} {
  func.func @_rmsnorm_kernel(%arg0: i32, %arg1: memref<16x32xf32, #tpu.memory_space<vmem>>, %arg2: memref<16x32xf32, #tpu.memory_space<vmem>>) attributes {dimension_semantics = [#tpu.dimension_semantics<parallel>], iteration_bounds = array<i64: 1>, scalar_prefetch = 0 : i64, scratch_operands = 0 : i64, tpu.core_type = #tpu.core_type<tc>, window_params = [{transform_indices = @transform_0, window_bounds = array<i64: 16, 32>}, {transform_indices = @transform_1, window_bounds = array<i64: 16, 32>}]} {
    %c0 = arith.constant 0 : index
    %c0_0 = arith.constant 0 : index
    %0 = vector.load %arg1[%c0, %c0_0] : memref<16x32xf32, #tpu.memory_space<vmem>>, vector<16x32xf32>
    %1 = arith.mulf %0, %0 : vector<16x32xf32>
    %cst = arith.constant dense<0.000000e+00> : vector<16xf32>
    %2 = vector.multi_reduction <add>, %1, %cst [1] : vector<16x32xf32> to vector<16xf32>
    %3 = vector.shape_cast %2 : vector<16xf32> to vector<16x1xf32>
    %cst_1 = arith.constant 3.200000e+01 : f32
    %4 = vector.broadcast %cst_1 : f32 to vector<16x1xf32>
    %5 = arith.divf %3, %4 : vector<16x1xf32>
    %cst_2 = arith.constant 9.99999997E-7 : f32
    %6 = vector.broadcast %cst_2 : f32 to vector<16x1xf32>
    %7 = arith.addf %5, %6 : vector<16x1xf32>
    %8 = math.rsqrt %7 : vector<16x1xf32>
    %9 = vector.broadcast %8 : vector<16x1xf32> to vector<16x32xf32>
    %10 = arith.mulf %0, %9 : vector<16x32xf32>
    %c0_3 = arith.constant 0 : index
    %c0_4 = arith.constant 0 : index
    %11 = vector.load %arg2[%c0_3, %c0_4] : memref<16x32xf32, #tpu.memory_space<vmem>>, vector<16x32xf32>
    tpu.vector_store %arg2[%c0_3, %c0_4], %10 {strides = array<i32>} : memref<16x32xf32, #tpu.memory_space<vmem>>, vector<16x32xf32>,
    return
  }
  func.func @transform_0(%arg0: i32) -> (i32, i32) {
    %c0_i32 = arith.constant 0 : i32
    %c0_i32_0 = arith.constant 0 : i32
    return %arg0, %c0_i32 : i32, i32
  }
  func.func @transform_1(%arg0: i32) -> (i32, i32) {
    %c0_i32 = arith.constant 0 : i32
    %c0_i32_0 = arith.constant 0 : i32
    return %arg0, %c0_i32 : i32, i32
  }
}

</mosaic_0001>

<llo_original>
// kernel: tpu_custom_call.1
$region0: #{tpu_custom_call.1}
  #allocation0 [shape = 'u32[]', space=smem, size = 0x4, offset = 0x4, fixed_abs, tag = 'smem constant byte address 0x4 - core index']
  #allocation1 [shape = 'u32[72,128]{1,0:T(1,128)}', space=vmem, size = 0x9000, scoped, tag = 'internal scratch']
  %s0 = inlined_call_operand.hbm [shape: f32[16,32], index: 0, kind: input, shape index: {}]
  %s1 = inlined_call_operand.hbm [shape: f32[16,32], index: 1, kind: output, shape index: {}]
  %s2 = sld [smem:[#allocation0]]
  $region18: #{tpu_custom_call.1} parent=0
    _
  %s4 = ssub.s32 1, %s2
  %s5 = scalar_select 0, %s4, %s2
  $region1: #{tpu_custom_call.1} parent=0
    #allocation2 [shape = 'u8[8192]{0}', space=vmem, size = 0x2000, scoped, tag = 'input window, operand 0, single buffered']
    #allocation3 [shape = 's32[1]{0}', space=sflag, size = 0x4, scoped, tag = 'scoped memory for tpu_custom_call.1']
    #allocation4 [shape = 's32[1]{0}', space=sflag, size = 0x4, scoped, tag = 'scoped memory for tpu_custom_call.1']
    #allocation5 [shape = 'u8[8192]{0}', space=vmem, size = 0x2000, scoped, tag = 'output window, operand 0, single buffered']
    %6 = vsyncpa [#allocation3], 0
    %7 = vsyncpa [#allocation4], 0
    // Predicated region
    $region2: #{tpu_custom_call.1} parent=1 // pred_check
      _
    $region3: #{tpu_custom_call.1} parent=1 // pred_check_branch
      %9 = sbr.rel (0) target = $region5
    $region4: #{tpu_custom_call.1} parent=1 // pred_region
      %11 = vsyncadd [#allocation3], 0
      %s12 = sshll.u32 %s0, 4
      %s13 = int_to_ptr.hbm [resolvable:$true] %s12
      %s14 = sshll.u32 [#allocation2], 4
      %s15 = int_to_ptr.vmem [resolvable:$true] %s14
      %20 = dma.hbm_to_vmem [thread:$0]  %s13, 256, %s15, [#allocation3], 128, 128, 8
    $region5: #{tpu_custom_call.1} parent=1 // pred_fallthru
      _
    // Predicated region
    $region6: #{tpu_custom_call.1} parent=1 // pred_check
      _
    $region7: #{tpu_custom_call.1} parent=1 // pred_check_branch
      %22 = sbr.rel (0) target = $region9
    $region8: #{tpu_custom_call.1} parent=1 // pred_region
      %24 = dma.done [#allocation3], 256
    $region9: #{tpu_custom_call.1} parent=1 // pred_fallthru
      _
    %v25 = vld [vmem:[#allocation2] sm:$0xff]
    %v26 = vld [vmem:[#allocation2 + $0x8] sm:$0xff]
    %v27 = vmul.f32 %v25, %v25
    %v28 = vmul.f32 %v26, %v26
    %vm29 = vcmask 261120
    %v30 = vsel %vm29, %v27, 0.0
    %31 = vadd.xlane.f32.xlu0 %v30
    %v32 = vpop.xlane.xlu0 %31
    %v33 = vsel %vm29, %v28, 0.0
    %34 = vadd.xlane.f32.xlu0 %v33
    %v35 = vpop.xlane.xlu0 %34
    %v36 = vrcp.pop 32.0
    %v37 = vmul.f32 32.0, %v36
    %v38 = vsub.f32 1.0, %v37
    %v39 = vmul.f32 %v36, %v38
    %v40 = vadd.f32 %v36, %v39
    %vm41 = vweird.f32 %v36
    %v42 = vsel %vm41, %v36, %v40
    %v43 = vmul.f32 %v32, %v42
    %v44 = vmul.f32 %v35, %v42
    %v45 = vadd.f32 %v43, 1e-06
    %v46 = vadd.f32 %v44, 1e-06
    %v47 = vrsqrt.pop %v45
    %v48 = vmul.f32 %v47, %v45
    %v49 = vmul.f32 %v48, %v47
    %v50 = vmul.f32 0.5, %v49
    %v51 = vsub.f32 1.5, %v50
    %v52 = vmul.f32 %v47, %v51
    %vm53 = vweird.f32 %v45
    %vm54 = vweird.f32 %v47
    %vm55 = vmor %vm53, %vm54
    %v56 = vsel %vm55, %v47, %v52
    %v57 = vrsqrt.pop %v46
    %v58 = vmul.f32 %v57, %v46
    %v59 = vmul.f32 %v58, %v57
    %v60 = vmul.f32 0.5, %v59
    %v61 = vsub.f32 1.5, %v60
    %v62 = vmul.f32 %v57, %v61
    %vm63 = vweird.f32 %v46
    %vm64 = vweird.f32 %v57
    %vm65 = vmor %vm63, %vm64
    %v66 = vsel %vm65, %v57, %v62
    %v67 = vmul.f32 %v25, %v56
    %v68 = vmul.f32 %v26, %v66
    %69 = vst.msk [vmem:[#allocation5] sm:$0xff] %vm29, %v67
    %70 = vst.msk [vmem:[#allocation5 + $0x8] sm:$0xff] %vm29, %v68
    // Predicated region
    $region10: #{tpu_custom_call.1} parent=1 // pred_check
      _
    $region11: #{tpu_custom_call.1} parent=1 // pred_check_branch
      %72 = sbr.rel (0) target = $region13
    $region12: #{tpu_custom_call.1} parent=1 // pred_region
      %74 = vsyncadd [#allocation4], 0
      %s75 = sshll.u32 [#allocation5], 4
      %s76 = int_to_ptr.vmem [resolvable:$true] %s75
      %s77 = sshll.u32 %s1, 4
      %s78 = int_to_ptr.hbm [resolvable:$true] %s77
      %83 = dma.vmem_to_hbm [thread:$0]  %s76, 256, %s78, [#allocation4], 128, 128, 8
    $region13: #{tpu_custom_call.1} parent=1 // pred_fallthru
      _
    // Predicated region
    $region14: #{tpu_custom_call.1} parent=1 // pred_check
      _
    $region15: #{tpu_custom_call.1} parent=1 // pred_check_branch
      %85 = sbr.rel (0) target = $region17
    $region16: #{tpu_custom_call.1} parent=1 // pred_region
      %87 = dma.done [#allocation4], 256
    $region17: #{tpu_custom_call.1} parent=1 // pred_fallthru
      _
    %88 = vsyncpa [#allocation3], 1
    %89 = vsyncpa [#allocation4], 1

</llo_original>
